<compile_context>
chip_gen: v7x
topology: tpu7x:2x2x1
jax: 0.10.0
libtpu: 0.0.40
codegen_flags: <defaults>
</compile_context>

<pallas_src>
import functools

import jax
import jax.numpy as jnp
import numpy as np
from jax.experimental import pallas as pl
from jax.experimental.pallas import tpu as pltpu


def _round_up(x, m):
    return ((x + m - 1) // m) * m


def _cdiv(a, b):
    return (a + b - 1) // b


def _mlp_kernel(x1_ref, x2_ref, x3_ref, x4_ref,
                w1_ref, b1_ref, w2_ref, b2_ref,
                w3_ref, b3_ref, w4_ref, b4_ref, o_ref, *, dim1, dim4):
    # ---- fc1 + ReLU -------------------------------------------------------
    # cat(x1..x4) @ W1 expressed as four partial K=dim1 dots accumulated in
    # f32: fuses the torch.cat with no lane-offset concat and no HBM roundtrip.
    x_refs = (x1_ref, x2_ref, x3_ref, x4_ref)
    acc = jnp.dot(x1_ref[...].astype(jnp.bfloat16), w1_ref[0:dim1, :],
                  preferred_element_type=jnp.float32)
    for k in range(1, 4):
        acc += jnp.dot(x_refs[k][...].astype(jnp.bfloat16),
                       w1_ref[k * dim1:(k + 1) * dim1, :],
                       preferred_element_type=jnp.float32)
    h = jnp.maximum(acc + b1_ref[...], 0.0)

    # ---- fc2 + ReLU (bf16 operands, f32 accumulate / bias / ReLU) ----------
    h = jnp.dot(h.astype(jnp.bfloat16), w2_ref[...],
                preferred_element_type=jnp.float32)
    h = jnp.maximum(h + b2_ref[...], 0.0)

    # ---- fc3 + ReLU ---------------------------------------------------------
    h = jnp.dot(h.astype(jnp.bfloat16), w3_ref[...],
                preferred_element_type=jnp.float32)
    h = jnp.maximum(h + b3_ref[...], 0.0)

    # TODO(synk): dropout is identity (eval mode); training-mode dropout would
    # use pltpu.prng_seed + pltpu.prng_random_bits to build the keep mask.

    # ---- fc4 ----------------------------------------------------------------
    if dim4 == 1:
        # w4_ref is (1, dim2): VPU multiply + XLU lane reduction instead of
        # pushing a 1-wide tile through the MXU result FIFO.
        o = jnp.sum(h * w4_ref[...], axis=-1, keepdims=True) + b4_ref[...]
    else:
        o = jnp.dot(h.astype(jnp.bfloat16), w4_ref[...],
                    preferred_element_type=jnp.float32) + b4_ref[...]
    o_ref[...] = o.astype(o_ref.dtype)


def merge_layer_output(x1, x2, x3, x4, params, *,
                       max_batch_tile=2048, min_grid_steps=2):
    """Fused forward pass. x1..x4: (B, dim1) float32. Returns (B, dim4) f32."""
    w1, b1, w2, b2, w3, b3, w4, b4 = params
    B, dim1 = x1.shape
    dim2, dim4 = w4.shape

    # bf16 matmul operands (MXU-native on all generations; halves weight DMA).
    # Tiny one-time cast here; in production the weights would live in HBM as
    # bf16 already. Biases stay f32.
    w1b = w1.astype(jnp.bfloat16)
    w2b = w2.astype(jnp.bfloat16)
    w3b = w3.astype(jnp.bfloat16)
    if dim4 == 1:
        # VPU-reduce fc4 path: present w4 as a (1, dim2) f32 row (pure reshape).
        w4k = w4.reshape(1, dim2)
    else:
        w4k = w4.astype(jnp.bfloat16)

    # Batch tiling: big tiles (amortize ~0.35 us/grid-step overhead) sized to
    # (nearly) divide B so there is NO wrapper-side jnp.pad -- Pallas masks the
    # trailing partial block.  For large B keep >= min_grid_steps tiles so both
    # of v7x's TensorCores get work via the "parallel" axis.
    n_tiles = _cdiv(B, max_batch_tile)
    if B >= min_grid_steps * 512:
        n_tiles = max(n_tiles, min_grid_steps)
    tm = _round_up(_cdiv(B, n_tiles), 8)
    grid = (_cdiv(B, tm),)

    def batch_spec(cols):
        # Streamed over the batch axis only.
        return pl.BlockSpec((tm, cols), lambda i: (i, 0))

    def resident_spec(shape):
        # Constant block index => tile fetched once, VMEM-resident across all
        # grid iterations.
        return pl.BlockSpec(shape, lambda i: (0, 0))

    in_specs = [batch_spec(dim1)] * 4 + [
        resident_spec(w1b.shape), resident_spec(b1.shape),
        resident_spec(w2b.shape), resident_spec(b2.shape),
        resident_spec(w3b.shape), resident_spec(b3.shape),
        resident_spec(w4k.shape), resident_spec(b4.shape),
    ]

    out = pl.pallas_call(
        functools.partial(_mlp_kernel, dim1=dim1, dim4=dim4),
        out_shape=jax.ShapeDtypeStruct((B, dim4), jnp.float32),
        grid_spec=pltpu.PrefetchScalarGridSpec(
            num_scalar_prefetch=0,
            grid=grid,
            in_specs=in_specs,
            out_specs=pl.BlockSpec((tm, dim4), lambda i: (i, 0)),
        ),
        compiler_params=pltpu.CompilerParams(
            # Batch tiles are independent: v7x shards them over its 2 TCs;
            # harmless on v5e/v6e and at grid=(1,).
            dimension_semantics=("parallel",)),
    )(x1, x2, x3, x4, w1b, b1, w2b, b2, w3b, b3, w4k, b4)
    return out


def init_params(key, dim1, dim2, dim3, dim4):
    """Deterministic synthetic init matching the module's parameter shapes.
    fc1/fc2 weights: xavier-normal; fc3/fc4: PyTorch-default-style uniform.
    All weights stored (in, out); biases stored (1, out); everything f32."""
    ks = jax.random.split(key, 8)

    def xavier_normal(k, fan_in, fan_out):
        std = np.sqrt(2.0 / (fan_in + fan_out))
        return jax.random.normal(k, (fan_in, fan_out), jnp.float32) * std

    def torch_uniform(k, fan_in, shape):
        bound = 1.0 / np.sqrt(fan_in)
        return jax.random.uniform(k, shape, jnp.float32, -bound, bound)

    w1 = xavier_normal(ks[0], dim1 * 4, dim3)
    b1 = torch_uniform(ks[1], dim1 * 4, (1, dim3))
    w2 = xavier_normal(ks[2], dim3, dim3)
    b2 = torch_uniform(ks[3], dim3, (1, dim3))
    w3 = torch_uniform(ks[4], dim3, (dim3, dim2))
    b3 = torch_uniform(ks[5], dim3, (1, dim2))
    w4 = torch_uniform(ks[6], dim2, (dim2, dim4))
    b4 = torch_uniform(ks[7], dim2, (1, dim4))
    return (w1, b1, w2, b2, w3, b3, w4, b4)


def reference_forward(x1, x2, x3, x4, params):
    """Pure-JAX f32 reference of the PyTorch module in eval mode."""
    w1, b1, w2, b2, w3, b3, w4, b4 = params
    x = jnp.concatenate([x1, x2, x3, x4], axis=-1)
    h = jax.nn.relu(x @ w1 + b1)
    h = jax.nn.relu(h @ w2 + b2)
    h = jax.nn.relu(h @ w3 + b3)  # dropout is identity in eval mode
    return h @ w4 + b4


if __name__ == "__main__":
    # Small shapes consistent with the module: dim1 per-input width (concat
    # gives 4*dim1), dim3 hidden width, dim2 second hidden, dim4=1 output.
    B, dim1, dim2, dim3, dim4 = 16, 32, 32, 128, 1

    key = jax.random.PRNGKey(0)
    kx, kp = jax.random.split(key)
    kx1, kx2, kx3, kx4 = jax.random.split(kx, 4)
    x1 = jax.random.normal(kx1, (B, dim1), jnp.float32)
    x2 = jax.random.normal(kx2, (B, dim1), jnp.float32)
    x3 = jax.random.normal(kx3, (B, dim1), jnp.float32)
    x4 = jax.random.normal(kx4, (B, dim1), jnp.float32)

    params = init_params(kp, dim1, dim2, dim3, dim4)

    out = merge_layer_output(x1, x2, x3, x4, params)
    out = jax.block_until_ready(out)

    ref = jax.block_until_ready(reference_forward(x1, x2, x3, x4, params))
    # bf16 MXU operands (f32 accumulation) => relaxed tolerance vs f32 reference.
    np.testing.assert_allclose(np.asarray(out), np.asarray(ref),
                               rtol=2e-2, atol=2e-2)
    print("KERNEL_OK")
</pallas_src>

<mosaic_0001>
module attributes {stable_mosaic.version = 11 : i64} {
  func.func @_mlp_kernel(%arg0: i32, %arg1: memref<16x32xf32, #tpu.memory_space<vmem>>, %arg2: memref<16x32xf32, #tpu.memory_space<vmem>>, %arg3: memref<16x32xf32, #tpu.memory_space<vmem>>, %arg4: memref<16x32xf32, #tpu.memory_space<vmem>>, %arg5: memref<128x128xbf16, #tpu.memory_space<vmem>>, %arg6: memref<1x128xf32, #tpu.memory_space<vmem>>, %arg7: memref<128x128xbf16, #tpu.memory_space<vmem>>, %arg8: memref<1x128xf32, #tpu.memory_space<vmem>>, %arg9: memref<128x32xbf16, #tpu.memory_space<vmem>>, %arg10: memref<1x32xf32, #tpu.memory_space<vmem>>, %arg11: memref<1x32xf32, #tpu.memory_space<vmem>>, %arg12: memref<1x1xf32, #tpu.memory_space<vmem>>, %arg13: memref<16x1xf32, #tpu.memory_space<vmem>>) attributes {dimension_semantics = [#tpu.dimension_semantics<parallel>], iteration_bounds = array<i64: 1>, scalar_prefetch = 0 : i64, scratch_operands = 0 : i64, tpu.core_type = #tpu.core_type<tc>, window_params = [{transform_indices = @transform_0, window_bounds = array<i64: 16, 32>}, {transform_indices = @transform_1, window_bounds = array<i64: 16, 32>}, {transform_indices = @transform_2, window_bounds = array<i64: 16, 32>}, {transform_indices = @transform_3, window_bounds = array<i64: 16, 32>}, {pipeline_mode = #tpu.pipeline_mode<synchronous>, transform_indices = @transform_4, window_bounds = array<i64: 128, 128>}, {pipeline_mode = #tpu.pipeline_mode<synchronous>, transform_indices = @transform_5, window_bounds = array<i64: 1, 128>}, {pipeline_mode = #tpu.pipeline_mode<synchronous>, transform_indices = @transform_6, window_bounds = array<i64: 128, 128>}, {pipeline_mode = #tpu.pipeline_mode<synchronous>, transform_indices = @transform_7, window_bounds = array<i64: 1, 128>}, {pipeline_mode = #tpu.pipeline_mode<synchronous>, transform_indices = @transform_8, window_bounds = array<i64: 128, 32>}, {pipeline_mode = #tpu.pipeline_mode<synchronous>, transform_indices = @transform_9, window_bounds = array<i64: 1, 32>}, {pipeline_mode = #tpu.pipeline_mode<synchronous>, transform_indices = @transform_10, window_bounds = array<i64: 1, 32>}, {pipeline_mode = #tpu.pipeline_mode<synchronous>, transform_indices = @transform_11, window_bounds = array<i64: 1, 1>}, {transform_indices = @transform_12, window_bounds = array<i64: 16, 1>}]} {
    %c0 = arith.constant 0 : index
    %c0_0 = arith.constant 0 : index
    %0 = vector.load %arg1[%c0, %c0_0] : memref<16x32xf32, #tpu.memory_space<vmem>>, vector<16x32xf32>
    %1 = arith.truncf %0 : vector<16x32xf32> to vector<16x32xbf16>
    %c0_1 = arith.constant 0 : index
    %c0_2 = arith.constant 0 : index
    %2 = vector.load %arg5[%c0_1, %c0_2] : memref<128x128xbf16, #tpu.memory_space<vmem>>, vector<32x128xbf16>
    %cst = arith.constant dense<0.000000e+00> : vector<16x128xf32>
    %3 = tpu.matmul %1, %2, %cst {dimension_numbers = #tpu.dot_dimension_numbers<[1], [0], [0], [1], [0, 0, 1, 1], [], []>} : vector<16x32xbf16>, vector<32x128xbf16>, vector<16x128xf32> -> vector<16x128xf32>
    %c0_3 = arith.constant 0 : index
    %c0_4 = arith.constant 0 : index
    %4 = vector.load %arg2[%c0_3, %c0_4] : memref<16x32xf32, #tpu.memory_space<vmem>>, vector<16x32xf32>
    %5 = arith.truncf %4 : vector<16x32xf32> to vector<16x32xbf16>
    %c32 = arith.constant 32 : index
    %c0_5 = arith.constant 0 : index
    %6 = vector.load %arg5[%c32, %c0_5] : memref<128x128xbf16, #tpu.memory_space<vmem>>, vector<32x128xbf16>
    %cst_6 = arith.constant dense<0.000000e+00> : vector<16x128xf32>
    %7 = tpu.matmul %5, %6, %cst_6 {dimension_numbers = #tpu.dot_dimension_numbers<[1], [0], [0], [1], [0, 0, 1, 1], [], []>} : vector<16x32xbf16>, vector<32x128xbf16>, vector<16x128xf32> -> vector<16x128xf32>
    %8 = arith.addf %3, %7 : vector<16x128xf32>
    %c0_7 = arith.constant 0 : index
    %c0_8 = arith.constant 0 : index
    %9 = vector.load %arg3[%c0_7, %c0_8] : memref<16x32xf32, #tpu.memory_space<vmem>>, vector<16x32xf32>
    %10 = arith.truncf %9 : vector<16x32xf32> to vector<16x32xbf16>
    %c64 = arith.constant 64 : index
    %c0_9 = arith.constant 0 : index
    %11 = vector.load %arg5[%c64, %c0_9] : memref<128x128xbf16, #tpu.memory_space<vmem>>, vector<32x128xbf16>
    %cst_10 = arith.constant dense<0.000000e+00> : vector<16x128xf32>
    %12 = tpu.matmul %10, %11, %cst_10 {dimension_numbers = #tpu.dot_dimension_numbers<[1], [0], [0], [1], [0, 0, 1, 1], [], []>} : vector<16x32xbf16>, vector<32x128xbf16>, vector<16x128xf32> -> vector<16x128xf32>
    %13 = arith.addf %8, %12 : vector<16x128xf32>
    %c0_11 = arith.constant 0 : index
    %c0_12 = arith.constant 0 : index
    %14 = vector.load %arg4[%c0_11, %c0_12] : memref<16x32xf32, #tpu.memory_space<vmem>>, vector<16x32xf32>
    %15 = arith.truncf %14 : vector<16x32xf32> to vector<16x32xbf16>
    %c96 = arith.constant 96 : index
    %c0_13 = arith.constant 0 : index
    %16 = vector.load %arg5[%c96, %c0_13] : memref<128x128xbf16, #tpu.memory_space<vmem>>, vector<32x128xbf16>
    %cst_14 = arith.constant dense<0.000000e+00> : vector<16x128xf32>
    %17 = tpu.matmul %15, %16, %cst_14 {dimension_numbers = #tpu.dot_dimension_numbers<[1], [0], [0], [1], [0, 0, 1, 1], [], []>} : vector<16x32xbf16>, vector<32x128xbf16>, vector<16x128xf32> -> vector<16x128xf32>
    %18 = arith.addf %13, %17 : vector<16x128xf32>
    %c0_15 = arith.constant 0 : index
    %c0_16 = arith.constant 0 : index
    %19 = vector.load %arg6[%c0_15, %c0_16] : memref<1x128xf32, #tpu.memory_space<vmem>>, vector<1x128xf32>
    %20 = vector.broadcast %19 : vector<1x128xf32> to vector<16x128xf32>
    %21 = arith.addf %18, %20 : vector<16x128xf32>
    %cst_17 = arith.constant 0.000000e+00 : f32
    %22 = vector.broadcast %cst_17 : f32 to vector<16x128xf32>
    %23 = arith.maximumf %21, %22 : vector<16x128xf32>
    %24 = arith.truncf %23 : vector<16x128xf32> to vector<16x128xbf16>
    %c0_18 = arith.constant 0 : index
    %c0_19 = arith.constant 0 : index
    %25 = vector.load %arg7[%c0_18, %c0_19] : memref<128x128xbf16, #tpu.memory_space<vmem>>, vector<128x128xbf16>
    %cst_20 = arith.constant dense<0.000000e+00> : vector<16x128xf32>
    %26 = tpu.matmul %24, %25, %cst_20 {dimension_numbers = #tpu.dot_dimension_numbers<[1], [0], [0], [1], [0, 0, 1, 1], [], []>} : vector<16x128xbf16>, vector<128x128xbf16>, vector<16x128xf32> -> vector<16x128xf32>
    %c0_21 = arith.constant 0 : index
    %c0_22 = arith.constant 0 : index
    %27 = vector.load %arg8[%c0_21, %c0_22] : memref<1x128xf32, #tpu.memory_space<vmem>>, vector<1x128xf32>
    %28 = vector.broadcast %27 : vector<1x128xf32> to vector<16x128xf32>
    %29 = arith.addf %26, %28 : vector<16x128xf32>
    %cst_23 = arith.constant 0.000000e+00 : f32
    %30 = vector.broadcast %cst_23 : f32 to vector<16x128xf32>
    %31 = arith.maximumf %29, %30 : vector<16x128xf32>
    %32 = arith.truncf %31 : vector<16x128xf32> to vector<16x128xbf16>
    %c0_24 = arith.constant 0 : index
    %c0_25 = arith.constant 0 : index
    %33 = vector.load %arg9[%c0_24, %c0_25] : memref<128x32xbf16, #tpu.memory_space<vmem>>, vector<128x32xbf16>
    %cst_26 = arith.constant dense<0.000000e+00> : vector<16x32xf32>
    %34 = tpu.matmul %32, %33, %cst_26 {dimension_numbers = #tpu.dot_dimension_numbers<[1], [0], [0], [1], [0, 0, 1, 1], [], []>} : vector<16x128xbf16>, vector<128x32xbf16>, vector<16x32xf32> -> vector<16x32xf32>
    %c0_27 = arith.constant 0 : index
    %c0_28 = arith.constant 0 : index
    %35 = vector.load %arg10[%c0_27, %c0_28] : memref<1x32xf32, #tpu.memory_space<vmem>>, vector<1x32xf32>
    %36 = vector.broadcast %35 : vector<1x32xf32> to vector<16x32xf32>
    %37 = arith.addf %34, %36 : vector<16x32xf32>
    %cst_29 = arith.constant 0.000000e+00 : f32
    %38 = vector.broadcast %cst_29 : f32 to vector<16x32xf32>
    %39 = arith.maximumf %37, %38 : vector<16x32xf32>
    %c0_30 = arith.constant 0 : index
    %c0_31 = arith.constant 0 : index
    %40 = vector.load %arg11[%c0_30, %c0_31] : memref<1x32xf32, #tpu.memory_space<vmem>>, vector<1x32xf32>
    %41 = vector.broadcast %40 : vector<1x32xf32> to vector<16x32xf32>
    %42 = arith.mulf %39, %41 : vector<16x32xf32>
    %cst_32 = arith.constant dense<0.000000e+00> : vector<16xf32>
    %43 = vector.multi_reduction <add>, %42, %cst_32 [1] : vector<16x32xf32> to vector<16xf32>
    %44 = vector.shape_cast %43 : vector<16xf32> to vector<16x1xf32>
    %c0_33 = arith.constant 0 : index
    %c0_34 = arith.constant 0 : index
    %45 = vector.load %arg12[%c0_33, %c0_34] : memref<1x1xf32, #tpu.memory_space<vmem>>, vector<1x1xf32>
    %46 = vector.broadcast %45 : vector<1x1xf32> to vector<16x1xf32>
    %47 = arith.addf %44, %46 : vector<16x1xf32>
    %c0_35 = arith.constant 0 : index
    %c0_36 = arith.constant 0 : index
    %48 = vector.load %arg13[%c0_35, %c0_36] : memref<16x1xf32, #tpu.memory_space<vmem>>, vector<16x1xf32>
    tpu.vector_store %arg13[%c0_35, %c0_36], %47 {strides = array<i32>} : memref<16x1xf32, #tpu.memory_space<vmem>>, vector<16x1xf32>,
    return
  }
  func.func @transform_0(%arg0: i32) -> (i32, i32) {
    %c0_i32 = arith.constant 0 : i32
    %c0_i32_0 = arith.constant 0 : i32
    return %arg0, %c0_i32 : i32, i32
  }
  func.func @transform_1(%arg0: i32) -> (i32, i32) {
    %c0_i32 = arith.constant 0 : i32
    %c0_i32_0 = arith.constant 0 : i32
    return %arg0, %c0_i32 : i32, i32
  }
  func.func @transform_2(%arg0: i32) -> (i32, i32) {
    %c0_i32 = arith.constant 0 : i32
    %c0_i32_0 = arith.constant 0 : i32
    return %arg0, %c0_i32 : i32, i32
  }
  func.func @transform_3(%arg0: i32) -> (i32, i32) {
    %c0_i32 = arith.constant 0 : i32
    %c0_i32_0 = arith.constant 0 : i32
    return %arg0, %c0_i32 : i32, i32
  }
  func.func @transform_4(%arg0: i32) -> (i32, i32) {
    %c0_i32 = arith.constant 0 : i32
    %c0_i32_0 = arith.constant 0 : i32
    %c0_i32_1 = arith.constant 0 : i32
    return %c0_i32, %c0_i32_0 : i32, i32
  }
  func.func @transform_5(%arg0: i32) -> (i32, i32) {
    %c0_i32 = arith.constant 0 : i32
    %c0_i32_0 = arith.constant 0 : i32
    %c0_i32_1 = arith.constant 0 : i32
    return %c0_i32, %c0_i32_0 : i32, i32
  }
  func.func @transform_6(%arg0: i32) -> (i32, i32) {
    %c0_i32 = arith.constant 0 : i32
    %c0_i32_0 = arith.constant 0 : i32
    %c0_i32_1 = arith.constant 0 : i32
    return %c0_i32, %c0_i32_0 : i32, i32
  }
  func.func @transform_7(%arg0: i32) -> (i32, i32) {
    %c0_i32 = arith.constant 0 : i32
    %c0_i32_0 = arith.constant 0 : i32
    %c0_i32_1 = arith.constant 0 : i32
    return %c0_i32, %c0_i32_0 : i32, i32
  }
  func.func @transform_8(%arg0: i32) -> (i32, i32) {
    %c0_i32 = arith.constant 0 : i32
    %c0_i32_0 = arith.constant 0 : i32
    %c0_i32_1 = arith.constant 0 : i32
    return %c0_i32, %c0_i32_0 : i32, i32
  }
  func.func @transform_9(%arg0: i32) -> (i32, i32) {
    %c0_i32 = arith.constant 0 : i32
    %c0_i32_0 = arith.constant 0 : i32
    %c0_i32_1 = arith.constant 0 : i32
    return %c0_i32, %c0_i32_0 : i32, i32
  }
  func.func @transform_10(%arg0: i32) -> (i32, i32) {
    %c0_i32 = arith.constant 0 : i32
    %c0_i32_0 = arith.constant 0 : i32
    %c0_i32_1 = arith.constant 0 : i32
    return %c0_i32, %c0_i32_0 : i32, i32
  }
  func.func @transform_11(%arg0: i32) -> (i32, i32) {
    %c0_i32 = arith.constant 0 : i32
    %c0_i32_0 = arith.constant 0 : i32
    %c0_i32_1 = arith.constant 0 : i32
    return %c0_i32, %c0_i32_0 : i32, i32
  }
  func.func @transform_12(%arg0: i32) -> (i32, i32) {
    %c0_i32 = arith.constant 0 : i32
    %c0_i32_0 = arith.constant 0 : i32
    return %arg0, %c0_i32 : i32, i32
  }
}

</mosaic_0001>

<llo_original>
// kernel: tpu_custom_call.1
$region0: #{tpu_custom_call.1}
  #allocation0 [shape = 'u32[]', space=smem, size = 0x4, offset = 0x4, fixed_abs, tag = 'smem constant byte address 0x4 - core index']
  #allocation1 [shape = 'u32[144,128]{1,0:T(1,128)}', space=vmem, size = 0x12000, scoped, tag = 'internal scratch']
  #allocation2 [shape = 'f32[1,1]{1,0:T(1,128)S(1)}', space=vmem, size = 0x200, scoped, tag = 'scoped memory for tpu_custom_call.1']
  %s0 = inlined_call_operand.vmem [shape: f32[16,32], index: 0, kind: input, shape index: {}]
  %s1 = inlined_call_operand.hbm [shape: f32[16,32], index: 1, kind: input, shape index: {}]
  %s2 = inlined_call_operand.hbm [shape: f32[16,32], index: 2, kind: input, shape index: {}]
  %s3 = inlined_call_operand.hbm [shape: f32[16,32], index: 3, kind: input, shape index: {}]
  %s4 = inlined_call_operand.vmem [shape: bf16[128,128], index: 4, kind: input, shape index: {}]
  %s5 = inlined_call_operand.vmem [shape: f32[1,128], index: 5, kind: input, shape index: {}]
  %s6 = inlined_call_operand.hbm [shape: bf16[128,128], index: 6, kind: input, shape index: {}]
  %s7 = inlined_call_operand.vmem [shape: f32[1,128], index: 7, kind: input, shape index: {}]
  %s8 = inlined_call_operand.vmem [shape: bf16[128,32], index: 8, kind: input, shape index: {}]
  %s9 = inlined_call_operand.vmem [shape: f32[1,32], index: 9, kind: input, shape index: {}]
  %s10 = inlined_call_operand.vmem [shape: f32[1,32], index: 10, kind: input, shape index: {}]
  %s11 = inlined_call_operand.<no memory space> [shape: f32[1,1], index: 11, kind: input, shape index: {}]
  %s12 = inlined_call_operand.vmem [shape: f32[16,1], index: 12, kind: output, shape index: {}]
  %s13 = sld [smem:[#allocation0]]
  $region74: #{tpu_custom_call.1} parent=0
    _
  %s15 = ssub.s32 1, %s13
  %s16 = scalar_select 0, %s15, %s13
  %v17 = vstv %s11
  %18 = vst [vmem:[#allocation2] sm:$0x1] %v17
  $region1: #{tpu_custom_call.1} parent=0
    #allocation3 [shape = 'u8[8192]{0}', space=vmem, size = 0x2000, scoped, tag = 'input window, operand 1, single buffered']
    #allocation4 [shape = 's32[1]{0}', space=sflag, size = 0x4, scoped, tag = 'scoped memory for tpu_custom_call.1']
    #allocation5 [shape = 'u8[8192]{0}', space=vmem, size = 0x2000, scoped, tag = 'input window, operand 2, single buffered']
    #allocation6 [shape = 's32[1]{0}', space=sflag, size = 0x4, scoped, tag = 'scoped memory for tpu_custom_call.1']
    #allocation7 [shape = 'u8[8192]{0}', space=vmem, size = 0x2000, scoped, tag = 'input window, operand 3, single buffered']
    #allocation8 [shape = 'u8[32768]{0}', space=vmem, size = 0x8000, scoped, tag = 'input window, operand 6, single buffered']
    #allocation9 [shape = 's32[1]{0}', space=sflag, size = 0x4, scoped, tag = 'scoped memory for tpu_custom_call.1']
    %19 = vsyncpa [#allocation4], 0
    %20 = vsyncpa [#allocation6], 0
    %21 = vsyncpa [#allocation9], 0
    // Predicated region
    $region2: #{tpu_custom_call.1} parent=1 // pred_check
      _
    $region3: #{tpu_custom_call.1} parent=1 // pred_check_branch
      %23 = sbr.rel (0) target = $region5
    $region4: #{tpu_custom_call.1} parent=1 // pred_region
      _
    $region5: #{tpu_custom_call.1} parent=1 // pred_fallthru
      _
    // Predicated region
    $region6: #{tpu_custom_call.1} parent=1 // pred_check
      _
    $region7: #{tpu_custom_call.1} parent=1 // pred_check_branch
      %25 = sbr.rel (0) target = $region9
    $region8: #{tpu_custom_call.1} parent=1 // pred_region
      %s27 = ssub.s32 256, 256
      %28 = vsyncadd [#allocation4], %s27
      %s29 = sshll.u32 [#allocation3], 4
      %s30 = int_to_ptr.vmem [resolvable:$true] %s29
      %35 = dma.hbm_to_vmem [thread:$0]  %s1, 256, %s30, [#allocation4], 128, 128, 8
    $region9: #{tpu_custom_call.1} parent=1 // pred_fallthru
      _
    // Predicated region
    $region10: #{tpu_custom_call.1} parent=1 // pred_check
      _
    $region11: #{tpu_custom_call.1} parent=1 // pred_check_branch
      %37 = sbr.rel (0) target = $region13
    $region12: #{tpu_custom_call.1} parent=1 // pred_region
      %s39 = ssub.s32 256, 256
      %40 = vsyncadd [#allocation6], %s39
      %s41 = sshll.u32 [#allocation5], 4
      %s42 = int_to_ptr.vmem [resolvable:$true] %s41
      %47 = dma.hbm_to_vmem [thread:$0]  %s2, 256, %s42, [#allocation6], 128, 128, 8
    $region13: #{tpu_custom_call.1} parent=1 // pred_fallthru
      _
    // Predicated region
    $region14: #{tpu_custom_call.1} parent=1 // pred_check
      _
    $region15: #{tpu_custom_call.1} parent=1 // pred_check_branch
      %49 = sbr.rel (0) target = $region17
    $region16: #{tpu_custom_call.1} parent=1 // pred_region
      %s51 = ssub.s32 256, 256
      %52 = vsyncadd [#allocation6], %s51
      %s53 = sshll.u32 [#allocation7], 4
      %s54 = int_to_ptr.vmem [resolvable:$true] %s53
      %59 = dma.hbm_to_vmem [thread:$0]  %s3, 256, %s54, [#allocation6], 128, 128, 8
    $region17: #{tpu_custom_call.1} parent=1 // pred_fallthru
      _
    // Predicated region
    $region18: #{tpu_custom_call.1} parent=1 // pred_check
      _
    $region19: #{tpu_custom_call.1} parent=1 // pred_check_branch
      %61 = sbr.rel (0) target = $region21
    $region20: #{tpu_custom_call.1} parent=1 // pred_region
      _
    $region21: #{tpu_custom_call.1} parent=1 // pred_fallthru
      _
    // Predicated region
    $region22: #{tpu_custom_call.1} parent=1 // pred_check
      _
    $region23: #{tpu_custom_call.1} parent=1 // pred_check_branch
      %63 = sbr.rel (0) target = $region25
    $region24: #{tpu_custom_call.1} parent=1 // pred_region
      _
    $region25: #{tpu_custom_call.1} parent=1 // pred_fallthru
      _
    // Predicated region
    $region26: #{tpu_custom_call.1} parent=1 // pred_check
      _
    $region27: #{tpu_custom_call.1} parent=1 // pred_check_branch
      %65 = sbr.rel (0) target = $region29
    $region28: #{tpu_custom_call.1} parent=1 // pred_region
      %s67 = ssub.s32 1024, 1024
      %68 = vsyncadd [#allocation9], %s67
      %s69 = sshll.u32 [#allocation8], 4
      %s70 = int_to_ptr.vmem [resolvable:$true] %s69
      %75 = dma.hbm_to_vmem [thread:$0]  %s6, 1024, %s70, [#allocation9], 64, 64, 4
    $region29: #{tpu_custom_call.1} parent=1 // pred_fallthru
      _
    // Predicated region
    $region30: #{tpu_custom_call.1} parent=1 // pred_check
      _
    $region31: #{tpu_custom_call.1} parent=1 // pred_check_branch
      %77 = sbr.rel (0) target = $region33
    $region32: #{tpu_custom_call.1} parent=1 // pred_region
      _
    $region33: #{tpu_custom_call.1} parent=1 // pred_fallthru
      _
    // Predicated region
    $region34: #{tpu_custom_call.1} parent=1 // pred_check
      _
    $region35: #{tpu_custom_call.1} parent=1 // pred_check_branch
      %79 = sbr.rel (0) target = $region37
    $region36: #{tpu_custom_call.1} parent=1 // pred_region
      _
    $region37: #{tpu_custom_call.1} parent=1 // pred_fallthru
      _
    // Predicated region
    $region38: #{tpu_custom_call.1} parent=1 // pred_check
      _
    $region39: #{tpu_custom_call.1} parent=1 // pred_check_branch
      %81 = sbr.rel (0) target = $region41
    $region40: #{tpu_custom_call.1} parent=1 // pred_region
      _
    $region41: #{tpu_custom_call.1} parent=1 // pred_fallthru
      _
    // Predicated region
    $region42: #{tpu_custom_call.1} parent=1 // pred_check
      _
    $region43: #{tpu_custom_call.1} parent=1 // pred_check_branch
      %83 = sbr.rel (0) target = $region45
    $region44: #{tpu_custom_call.1} parent=1 // pred_region
      _
    $region45: #{tpu_custom_call.1} parent=1 // pred_fallthru
      _
    // Predicated region
    $region46: #{tpu_custom_call.1} parent=1 // pred_check
      _
    $region47: #{tpu_custom_call.1} parent=1 // pred_check_branch
      %85 = sbr.rel (0) target = $region49
    $region48: #{tpu_custom_call.1} parent=1 // pred_region
      _
    $region49: #{tpu_custom_call.1} parent=1 // pred_fallthru
      _
    // Predicated region
    $region50: #{tpu_custom_call.1} parent=1 // pred_check
      _
    $region51: #{tpu_custom_call.1} parent=1 // pred_check_branch
      %87 = sbr.rel (0) target = $region53
    $region52: #{tpu_custom_call.1} parent=1 // pred_region
      %88 = dma.done [#allocation4], 256
    $region53: #{tpu_custom_call.1} parent=1 // pred_fallthru
      _
    // Predicated region
    $region54: #{tpu_custom_call.1} parent=1 // pred_check
      _
    $region55: #{tpu_custom_call.1} parent=1 // pred_check_branch
      %90 = sbr.rel (0) target = $region57
    $region56: #{tpu_custom_call.1} parent=1 // pred_region
      %91 = dma.done [#allocation6], 256
    $region57: #{tpu_custom_call.1} parent=1 // pred_fallthru
      _
    // Predicated region
    $region58: #{tpu_custom_call.1} parent=1 // pred_check
      _
    $region59: #{tpu_custom_call.1} parent=1 // pred_check_branch
      %93 = sbr.rel (0) target = $region61
    $region60: #{tpu_custom_call.1} parent=1 // pred_region
      %94 = dma.done [#allocation6], 256
    $region61: #{tpu_custom_call.1} parent=1 // pred_fallthru
      _
    // Predicated region
    $region62: #{tpu_custom_call.1} parent=1 // pred_check
      _
    $region63: #{tpu_custom_call.1} parent=1 // pred_check_branch
      %96 = sbr.rel (0) target = $region65
    $region64: #{tpu_custom_call.1} parent=1 // pred_region
      %97 = dma.done [#allocation9], 1024
    $region65: #{tpu_custom_call.1} parent=1 // pred_fallthru
      _
    %v99 = vld [vmem:[%s0] sm:$0xff]
    %v100 = vld [vmem:[%s0 + $0x8] sm:$0xff]
    %v101 = vpack.c.bf16 %v100, %v99
    %v102 = vld [vmem:[%s4] sm:$0xf]
    %v103 = vld [vmem:[%s4 + $0x4] sm:$0xf]
    %v104 = vld [vmem:[%s4 + $0x8] sm:$0xf]
    %v105 = vld [vmem:[%s4 + $0xc] sm:$0xf]
    %v106 = vld [vmem:[#allocation3] sm:$0xff]
    %v107 = vld [vmem:[#allocation3 + $0x8] sm:$0xff]
    %v108 = vpack.c.bf16 %v107, %v106
    %v109 = vld [vmem:[%s4 + $0x10] sm:$0xf]
    %v110 = vld [vmem:[%s4 + $0x14] sm:$0xf]
    %v111 = vld [vmem:[%s4 + $0x18] sm:$0xf]
    %v112 = vld [vmem:[%s4 + $0x1c] sm:$0xf]
    %v117 = vunpack.c.l.b16 %v109
    %v118 = vunpack.c.l.b16 %v110
    %v119 = vunpack.c.l.b16 %v111
    %v120 = vunpack.c.l.b16 %v112
    %v121 = vpack.c.b16 %v118, %v117
    %v122 = vpack.c.b16 %v120, %v119
    %vm125 = vcmask 261120
    %v127 = vsel %vm125, %v108, 0
    %129 = vmatprep.subr.bf16.mxu0 0
    %130 = vmatpush1.bf16.msra.mxu0 %v121
    %131 = vmatprep.subr.bf16.mxu0 0
    %132 = vmatpush1.bf16.msra.mxu0 %v122
    %133 = vmatprep.subr.bf16.mxu0 0
    %134 = vmatpush1.bf16.msra.mxu0 0
    %135 = vmatprep.subr.bf16.mxu0 0
    %136 = vmatpush1.bf16.msra.mxu0 0
    %137 = vmatprep.subr.bf16.mxu0 0
    %138 = vmatpush1.bf16.msra.mxu0 0
    %139 = vmatprep.subr.bf16.mxu0 0
    %140 = vmatpush1.bf16.msra.mxu0 0
    %141 = vmatprep.subr.bf16.mxu0 0
    %142 = vmatpush1.bf16.msra.mxu0 0
    %143 = vmatprep.subr.bf16.mxu0 0
    %144 = vmatpush1.bf16.msra.mxu0 0
    %145 = vmatprep.subr.bf16.mxu0 0
    %146 = vmatpush1.bf16.msra.mxu0 0
    %147 = vmatprep.subr.bf16.mxu0 0
    %148 = vmatpush1.bf16.msra.mxu0 0
    %149 = vmatprep.subr.bf16.mxu0 0
    %150 = vmatpush1.bf16.msra.mxu0 0
    %151 = vmatprep.subr.bf16.mxu0 0
    %152 = vmatpush1.bf16.msra.mxu0 0
    %153 = vmatprep.subr.bf16.mxu0 0
    %154 = vmatpush1.bf16.msra.mxu0 0
    %155 = vmatprep.subr.bf16.mxu0 0
    %156 = vmatpush1.bf16.msra.mxu0 0
    %157 = vmatprep.subr.bf16.mxu0 0
    %158 = vmatpush1.bf16.msra.mxu0 0
    %159 = vmatprep.subr.bf16.mxu0 0
    %160 = vmatpush1.bf16.msra.mxu0 0
    %161 = vmatprep.mubr.bf16.mxu0 0
    %162 = vmatmul.mubr.bf16.gmra.mrb[0].mxu0 %v127
    %v163 = vpop.f32.mrb[0].mxu0
    %v164 = vadd.f32 0.0, %v163
    %v165 = vpop.f32.mrb[0].mxu0
    %v166 = vpop.f32.mrb[0].mxu0
    %v167 = vadd.f32 0.0, %v166
    %v168 = vpop.f32.mrb[0].mxu0
    %169 = vdwg.mxu0
    %v174 = vunpack.c.l.b16 %v102
    %v175 = vunpack.c.l.b16 %v103
    %v176 = vunpack.c.l.b16 %v104
    %v177 = vunpack.c.l.b16 %v105
    %v178 = vpack.c.b16 %v175, %v174
    %v179 = vpack.c.b16 %v177, %v176
    %v183 = vsel %vm125, %v101, 0
    %185 = vmatprep.subr.bf16.mxu0 0
    %186 = vmatpush1.bf16.msra.mxu0 %v178
    %187 = vmatprep.subr.bf16.mxu0 0
    %188 = vmatpush1.bf16.msra.mxu0 %v179
    %189 = vmatprep.subr.bf16.mxu0 0
    %190 = vmatpush1.bf16.msra.mxu0 0
    %191 = vmatprep.subr.bf16.mxu0 0
    %192 = vmatpush1.bf16.msra.mxu0 0
    %193 = vmatprep.subr.bf16.mxu0 0
    %194 = vmatpush1.bf16.msra.mxu0 0
    %195 = vmatprep.subr.bf16.mxu0 0
    %196 = vmatpush1.bf16.msra.mxu0 0
    %197 = vmatprep.subr.bf16.mxu0 0
    %198 = vmatpush1.bf16.msra.mxu0 0
    %199 = vmatprep.subr.bf16.mxu0 0
    %200 = vmatpush1.bf16.msra.mxu0 0
    %201 = vmatprep.subr.bf16.mxu0 0
    %202 = vmatpush1.bf16.msra.mxu0 0
    %203 = vmatprep.subr.bf16.mxu0 0
    %204 = vmatpush1.bf16.msra.mxu0 0
    %205 = vmatprep.subr.bf16.mxu0 0
    %206 = vmatpush1.bf16.msra.mxu0 0
    %207 = vmatprep.subr.bf16.mxu0 0
    %208 = vmatpush1.bf16.msra.mxu0 0
    %209 = vmatprep.subr.bf16.mxu0 0
    %210 = vmatpush1.bf16.msra.mxu0 0
    %211 = vmatprep.subr.bf16.mxu0 0
    %212 = vmatpush1.bf16.msra.mxu0 0
    %213 = vmatprep.subr.bf16.mxu0 0
    %214 = vmatpush1.bf16.msra.mxu0 0
    %215 = vmatprep.subr.bf16.mxu0 0
    %216 = vmatpush1.bf16.msra.mxu0 0
    %217 = vmatprep.mubr.bf16.mxu0 0
    %218 = vmatmul.mubr.bf16.gmra.mrb[0].mxu0 %v183
    %v219 = vpop.f32.mrb[0].mxu0
    %v220 = vadd.f32 %v164, %v219
    %v221 = vpop.f32.mrb[0].mxu0
    %v222 = vpop.f32.mrb[0].mxu0
    %v223 = vadd.f32 %v167, %v222
    %v224 = vpop.f32.mrb[0].mxu0
    %225 = vdwg.mxu0
    %v226 = vld [vmem:[#allocation5] sm:$0xff]
    %v227 = vld [vmem:[#allocation5 + $0x8] sm:$0xff]
    %v228 = vpack.c.bf16 %v227, %v226
    %v229 = vld [vmem:[%s4 + $0x20] sm:$0xf]
    %v230 = vld [vmem:[%s4 + $0x24] sm:$0xf]
    %v231 = vld [vmem:[%s4 + $0x28] sm:$0xf]
    %v232 = vld [vmem:[%s4 + $0x2c] sm:$0xf]
    %v237 = vunpack.c.l.b16 %v229
    %v238 = vunpack.c.l.b16 %v230
    %v239 = vunpack.c.l.b16 %v231
    %v240 = vunpack.c.l.b16 %v232
    %v241 = vpack.c.b16 %v238, %v237
    %v242 = vpack.c.b16 %v240, %v239
    %v246 = vsel %vm125, %v228, 0
    %248 = vmatprep.subr.bf16.mxu0 0
    %249 = vmatpush1.bf16.msra.mxu0 %v241
    %250 = vmatprep.subr.bf16.mxu0 0
    %251 = vmatpush1.bf16.msra.mxu0 %v242
    %252 = vmatprep.subr.bf16.mxu0 0
    %253 = vmatpush1.bf16.msra.mxu0 0
    %254 = vmatprep.subr.bf16.mxu0 0
    %255 = vmatpush1.bf16.msra.mxu0 0
    %256 = vmatprep.subr.bf16.mxu0 0
    %257 = vmatpush1.bf16.msra.mxu0 0
    %258 = vmatprep.subr.bf16.mxu0 0
    %259 = vmatpush1.bf16.msra.mxu0 0
    %260 = vmatprep.subr.bf16.mxu0 0
    %261 = vmatpush1.bf16.msra.mxu0 0
    %262 = vmatprep.subr.bf16.mxu0 0
    %263 = vmatpush1.bf16.msra.mxu0 0
    %264 = vmatprep.subr.bf16.mxu0 0
    %265 = vmatpush1.bf16.msra.mxu0 0
    %266 = vmatprep.subr.bf16.mxu0 0
    %267 = vmatpush1.bf16.msra.mxu0 0
    %268 = vmatprep.subr.bf16.mxu0 0
    %269 = vmatpush1.bf16.msra.mxu0 0
    %270 = vmatprep.subr.bf16.mxu0 0
    %271 = vmatpush1.bf16.msra.mxu0 0
    %272 = vmatprep.subr.bf16.mxu0 0
    %273 = vmatpush1.bf16.msra.mxu0 0
    %274 = vmatprep.subr.bf16.mxu0 0
    %275 = vmatpush1.bf16.msra.mxu0 0
    %276 = vmatprep.subr.bf16.mxu0 0
    %277 = vmatpush1.bf16.msra.mxu0 0
    %278 = vmatprep.subr.bf16.mxu0 0
    %279 = vmatpush1.bf16.msra.mxu0 0
    %280 = vmatprep.mubr.bf16.mxu0 0
    %281 = vmatmul.mubr.bf16.gmra.mrb[0].mxu0 %v246
    %v282 = vpop.f32.mrb[0].mxu0
    %v283 = vadd.f32 0.0, %v282
    %v284 = vpop.f32.mrb[0].mxu0
    %v285 = vpop.f32.mrb[0].mxu0
    %v286 = vadd.f32 0.0, %v285
    %v287 = vpop.f32.mrb[0].mxu0
    %288 = vdwg.mxu0
    %v289 = vadd.f32 %v220, %v283
    %v290 = vadd.f32 %v223, %v286
    %v291 = vld [vmem:[#allocation7] sm:$0xff]
    %v292 = vld [vmem:[#allocation7 + $0x8] sm:$0xff]
    %v293 = vpack.c.bf16 %v292, %v291
    %v294 = vld [vmem:[%s4 + $0x30] sm:$0xf]
    %v295 = vld [vmem:[%s4 + $0x34] sm:$0xf]
    %v296 = vld [vmem:[%s4 + $0x38] sm:$0xf]
    %v297 = vld [vmem:[%s4 + $0x3c] sm:$0xf]
    %v302 = vunpack.c.l.b16 %v294
    %v303 = vunpack.c.l.b16 %v295
    %v304 = vunpack.c.l.b16 %v296
    %v305 = vunpack.c.l.b16 %v297
    %v306 = vpack.c.b16 %v303, %v302
    %v307 = vpack.c.b16 %v305, %v304
    %v311 = vsel %vm125, %v293, 0
    %313 = vmatprep.subr.bf16.mxu0 0
    %314 = vmatpush1.bf16.msra.mxu0 %v306
    %315 = vmatprep.subr.bf16.mxu0 0
    %316 = vmatpush1.bf16.msra.mxu0 %v307
    %317 = vmatprep.subr.bf16.mxu0 0
    %318 = vmatpush1.bf16.msra.mxu0 0
    %319 = vmatprep.subr.bf16.mxu0 0
    %320 = vmatpush1.bf16.msra.mxu0 0
    %321 = vmatprep.subr.bf16.mxu0 0
    %322 = vmatpush1.bf16.msra.mxu0 0
    %323 = vmatprep.subr.bf16.mxu0 0
    %324 = vmatpush1.bf16.msra.mxu0 0
    %325 = vmatprep.subr.bf16.mxu0 0
    %326 = vmatpush1.bf16.msra.mxu0 0
    %327 = vmatprep.subr.bf16.mxu0 0
    %328 = vmatpush1.bf16.msra.mxu0 0
    %329 = vmatprep.subr.bf16.mxu0 0
    %330 = vmatpush1.bf16.msra.mxu0 0
    %331 = vmatprep.subr.bf16.mxu0 0
    %332 = vmatpush1.bf16.msra.mxu0 0
    %333 = vmatprep.subr.bf16.mxu0 0
    %334 = vmatpush1.bf16.msra.mxu0 0
    %335 = vmatprep.subr.bf16.mxu0 0
    %336 = vmatpush1.bf16.msra.mxu0 0
    %337 = vmatprep.subr.bf16.mxu0 0
    %338 = vmatpush1.bf16.msra.mxu0 0
    %339 = vmatprep.subr.bf16.mxu0 0
    %340 = vmatpush1.bf16.msra.mxu0 0
    %341 = vmatprep.subr.bf16.mxu0 0
    %342 = vmatpush1.bf16.msra.mxu0 0
    %343 = vmatprep.subr.bf16.mxu0 0
    %344 = vmatpush1.bf16.msra.mxu0 0
    %345 = vmatprep.mubr.bf16.mxu0 0
    %346 = vmatmul.mubr.bf16.gmra.mrb[0].mxu0 %v311
    %v347 = vpop.f32.mrb[0].mxu0
    %v348 = vadd.f32 0.0, %v347
    %v349 = vpop.f32.mrb[0].mxu0
    %v350 = vpop.f32.mrb[0].mxu0
    %v351 = vadd.f32 0.0, %v350
    %v352 = vpop.f32.mrb[0].mxu0
    %353 = vdwg.mxu0
    %v354 = vadd.f32 %v289, %v348
    %v355 = vadd.f32 %v290, %v351
    %v356 = vld [vmem:[%s5] sm:$0x1]
    %v358 = vlaneseq
    %v359 = vshrl.u32 %v358, 7
    %v360 = vsub.s32 0, %v359
    %v361 = vrot.slane %v356, %v360
    %v363 = vadd.f32 %v354, %v361
    %v364 = vadd.f32 %v355, %v361
    %v365 = vmax.f32 %v363, 0.0
    %v366 = vmax.f32 %v364, 0.0
    %v367 = vpack.c.bf16 %v366, %v365
    %v368 = vld [vmem:[#allocation8] sm:$0xf]
    %v369 = vld [vmem:[#allocation8 + $0x4] sm:$0xf]
    %v370 = vld [vmem:[#allocation8 + $0x8] sm:$0xf]
    %v371 = vld [vmem:[#allocation8 + $0xc] sm:$0xf]
    %v372 = vld [vmem:[#allocation8 + $0x10] sm:$0xf]
    %v373 = vld [vmem:[#allocation8 + $0x14] sm:$0xf]
    %v374 = vld [vmem:[#allocation8 + $0x18] sm:$0xf]
    %v375 = vld [vmem:[#allocation8 + $0x1c] sm:$0xf]
    %v376 = vld [vmem:[#allocation8 + $0x20] sm:$0xf]
    %v377 = vld [vmem:[#allocation8 + $0x24] sm:$0xf]
    %v378 = vld [vmem:[#allocation8 + $0x28] sm:$0xf]
    %v379 = vld [vmem:[#allocation8 + $0x2c] sm:$0xf]
    %v380 = vld [vmem:[#allocation8 + $0x30] sm:$0xf]
    %v381 = vld [vmem:[#allocation8 + $0x34] sm:$0xf]
    %v382 = vld [vmem:[#allocation8 + $0x38] sm:$0xf]
    %v383 = vld [vmem:[#allocation8 + $0x3c] sm:$0xf]
    %v384 = vld [vmem:[%s7] sm:$0x1]
    %v386 = vlaneseq
    %v387 = vshrl.u32 %v386, 7
    %v388 = vsub.s32 0, %v387
    %v389 = vrot.slane %v384, %v388
    %v407 = vunpack.c.l.b16 %v368
    %v408 = vunpack.c.l.b16 %v369
    %v409 = vunpack.c.l.b16 %v370
    %v410 = vunpack.c.l.b16 %v371
    %v411 = vunpack.c.l.b16 %v372
    %v412 = vunpack.c.l.b16 %v373
    %v413 = vunpack.c.l.b16 %v374
    %v414 = vunpack.c.l.b16 %v375
    %v415 = vunpack.c.l.b16 %v376
    %v416 = vunpack.c.l.b16 %v377
    %v417 = vunpack.c.l.b16 %v378
    %v418 = vunpack.c.l.b16 %v379
    %v419 = vunpack.c.l.b16 %v380
    %v420 = vunpack.c.l.b16 %v381
    %v421 = vunpack.c.l.b16 %v382
    %v422 = vunpack.c.l.b16 %v383
    %v423 = vpack.c.b16 %v408, %v407
    %v424 = vpack.c.b16 %v410, %v409
    %v425 = vpack.c.b16 %v412, %v411
    %v426 = vpack.c.b16 %v414, %v413
    %v427 = vpack.c.b16 %v416, %v415
    %v428 = vpack.c.b16 %v418, %v417
    %v429 = vpack.c.b16 %v420, %v419
    %v430 = vpack.c.b16 %v422, %v421
    %439 = vmatprep.subr.bf16.mxu0 0
    %440 = vmatpush1.bf16.msra.mxu0 %v423
    %441 = vmatprep.subr.bf16.mxu0 0
    %442 = vmatpush1.bf16.msra.mxu0 %v424
    %443 = vmatprep.subr.bf16.mxu0 0
    %444 = vmatpush1.bf16.msra.mxu0 %v425
    %445 = vmatprep.subr.bf16.mxu0 0
    %446 = vmatpush1.bf16.msra.mxu0 %v426
    %447 = vmatprep.subr.bf16.mxu0 0
    %448 = vmatpush1.bf16.msra.mxu0 %v427
    %449 = vmatprep.subr.bf16.mxu0 0
    %450 = vmatpush1.bf16.msra.mxu0 %v428
    %451 = vmatprep.subr.bf16.mxu0 0
    %452 = vmatpush1.bf16.msra.mxu0 %v429
    %453 = vmatprep.subr.bf16.mxu0 0
    %454 = vmatpush1.bf16.msra.mxu0 %v430
    %455 = vmatprep.subr.bf16.mxu0 0
    %456 = vmatpush1.bf16.msra.mxu0 0
    %457 = vmatprep.subr.bf16.mxu0 0
    %458 = vmatpush1.bf16.msra.mxu0 0
    %459 = vmatprep.subr.bf16.mxu0 0
    %460 = vmatpush1.bf16.msra.mxu0 0
    %461 = vmatprep.subr.bf16.mxu0 0
    %462 = vmatpush1.bf16.msra.mxu0 0
    %463 = vmatprep.subr.bf16.mxu0 0
    %464 = vmatpush1.bf16.msra.mxu0 0
    %465 = vmatprep.subr.bf16.mxu0 0
    %466 = vmatpush1.bf16.msra.mxu0 0
    %467 = vmatprep.subr.bf16.mxu0 0
    %468 = vmatpush1.bf16.msra.mxu0 0
    %469 = vmatprep.subr.bf16.mxu0 0
    %470 = vmatpush1.bf16.msra.mxu0 0
    %471 = vmatprep.mubr.bf16.mxu0 0
    %472 = vmatmul.mubr.bf16.gmra.mrb[0].mxu0 %v367
    %v473 = vpop.f32.mrb[0].mxu0
    %v474 = vadd.f32 %v389, %v473
    %v475 = vpop.f32.mrb[0].mxu0
    %v476 = vpop.f32.mrb[0].mxu0
    %v477 = vadd.f32 %v389, %v476
    %v478 = vpop.f32.mrb[0].mxu0
    %479 = vdwg.mxu0
    %v480 = vmax.f32 %v474, 0.0
    %v481 = vmax.f32 %v477, 0.0
    %v482 = vpack.c.bf16 %v481, %v480
    %v483 = vld [vmem:[%s8] sm:$0xf]
    %v484 = vld [vmem:[%s8 + $0x4] sm:$0xf]
    %v485 = vld [vmem:[%s8 + $0x8] sm:$0xf]
    %v486 = vld [vmem:[%s8 + $0xc] sm:$0xf]
    %v487 = vld [vmem:[%s8 + $0x10] sm:$0xf]
    %v488 = vld [vmem:[%s8 + $0x14] sm:$0xf]
    %v489 = vld [vmem:[%s8 + $0x18] sm:$0xf]
    %v490 = vld [vmem:[%s8 + $0x1c] sm:$0xf]
    %v491 = vld [vmem:[%s8 + $0x20] sm:$0xf]
    %v492 = vld [vmem:[%s8 + $0x24] sm:$0xf]
    %v493 = vld [vmem:[%s8 + $0x28] sm:$0xf]
    %v494 = vld [vmem:[%s8 + $0x2c] sm:$0xf]
    %v495 = vld [vmem:[%s8 + $0x30] sm:$0xf]
    %v496 = vld [vmem:[%s8 + $0x34] sm:$0xf]
    %v497 = vld [vmem:[%s8 + $0x38] sm:$0xf]
    %v498 = vld [vmem:[%s8 + $0x3c] sm:$0xf]
    %v499 = vld [vmem:[%s9] sm:$0x1]
    %v501 = vlaneseq
    %v502 = vshrl.u32 %v501, 7
    %v503 = vsub.s32 0, %v502
    %v504 = vrot.slane %v499, %v503
    %v522 = vunpack.c.l.b16 %v483
    %v523 = vunpack.c.l.b16 %v484
    %v524 = vunpack.c.l.b16 %v485
    %v525 = vunpack.c.l.b16 %v486
    %v526 = vunpack.c.l.b16 %v487
    %v527 = vunpack.c.l.b16 %v488
    %v528 = vunpack.c.l.b16 %v489
    %v529 = vunpack.c.l.b16 %v490
    %v530 = vunpack.c.l.b16 %v491
    %v531 = vunpack.c.l.b16 %v492
    %v532 = vunpack.c.l.b16 %v493
    %v533 = vunpack.c.l.b16 %v494
    %v534 = vunpack.c.l.b16 %v495
    %v535 = vunpack.c.l.b16 %v496
    %v536 = vunpack.c.l.b16 %v497
    %v537 = vunpack.c.l.b16 %v498
    %v538 = vpack.c.b16 %v523, %v522
    %v539 = vpack.c.b16 %v525, %v524
    %v540 = vpack.c.b16 %v527, %v526
    %v541 = vpack.c.b16 %v529, %v528
    %v542 = vpack.c.b16 %v531, %v530
    %v543 = vpack.c.b16 %v533, %v532
    %v544 = vpack.c.b16 %v535, %v534
    %v545 = vpack.c.b16 %v537, %v536
    %554 = vmatprep.subr.bf16.mxu0 0
    %555 = vmatpush1.bf16.msra.mxu0 %v538
    %556 = vmatprep.subr.bf16.mxu0 0
    %557 = vmatpush1.bf16.msra.mxu0 %v539
    %558 = vmatprep.subr.bf16.mxu0 0
    %559 = vmatpush1.bf16.msra.mxu0 %v540
    %560 = vmatprep.subr.bf16.mxu0 0
    %561 = vmatpush1.bf16.msra.mxu0 %v541
    %562 = vmatprep.subr.bf16.mxu0 0
    %563 = vmatpush1.bf16.msra.mxu0 %v542
    %564 = vmatprep.subr.bf16.mxu0 0
    %565 = vmatpush1.bf16.msra.mxu0 %v543
    %566 = vmatprep.subr.bf16.mxu0 0
    %567 = vmatpush1.bf16.msra.mxu0 %v544
    %568 = vmatprep.subr.bf16.mxu0 0
    %569 = vmatpush1.bf16.msra.mxu0 %v545
    %570 = vmatprep.subr.bf16.mxu0 0
    %571 = vmatpush1.bf16.msra.mxu0 0
    %572 = vmatprep.subr.bf16.mxu0 0
    %573 = vmatpush1.bf16.msra.mxu0 0
    %574 = vmatprep.subr.bf16.mxu0 0
    %575 = vmatpush1.bf16.msra.mxu0 0
    %576 = vmatprep.subr.bf16.mxu0 0
    %577 = vmatpush1.bf16.msra.mxu0 0
    %578 = vmatprep.subr.bf16.mxu0 0
    %579 = vmatpush1.bf16.msra.mxu0 0
    %580 = vmatprep.subr.bf16.mxu0 0
    %581 = vmatpush1.bf16.msra.mxu0 0
    %582 = vmatprep.subr.bf16.mxu0 0
    %583 = vmatpush1.bf16.msra.mxu0 0
    %584 = vmatprep.subr.bf16.mxu0 0
    %585 = vmatpush1.bf16.msra.mxu0 0
    %586 = vmatprep.mubr.bf16.mxu0 0
    %587 = vmatmul.mubr.bf16.gmra.mrb[0].mxu0 %v482
    %v588 = vpop.f32.mrb[0].mxu0
    %v589 = vadd.f32 %v504, %v588
    %v590 = vpop.f32.mrb[0].mxu0
    %v591 = vpop.f32.mrb[0].mxu0
    %v592 = vadd.f32 %v504, %v591
    %v593 = vpop.f32.mrb[0].mxu0
    %594 = vdwg.mxu0
    %v595 = vmax.f32 %v589, 0.0
    %v596 = vmax.f32 %v592, 0.0
    %v597 = vld [vmem:[%s10] sm:$0x1]
    %v599 = vlaneseq
    %v600 = vshrl.u32 %v599, 7
    %v601 = vsub.s32 0, %v600
    %v602 = vrot.slane %v597, %v601
    %v604 = vmul.f32 %v595, %v602
    %v605 = vmul.f32 %v596, %v602
    %v606 = vsel %vm125, %v604, 0.0
    %607 = vadd.xlane.f32.xlu0 %v606
    %v608 = vpop.xlane.xlu0 %607
    %v609 = vsel %vm125, %v605, 0.0
    %610 = vadd.xlane.f32.xlu0 %v609
    %v611 = vpop.xlane.xlu0 %610
    %v612 = vld [vmem:[#allocation2] sm:$0x1]
    %v614 = vlaneseq
    %v615 = vshrl.u32 %v614, 7
    %v616 = vsub.s32 0, %v615
    %v617 = vrot.slane %v612, %v616
    %v619 = vadd.f32 %v608, %v617
    %v620 = vadd.f32 %v611, %v617
    %vm621 = vcmask 7168
    %622 = vst.msk [vmem:[%s12] sm:$0xff] %vm621, %v619
    %623 = vst.msk [vmem:[%s12 + $0x8] sm:$0xff] %vm621, %v620
    // Predicated region
    $region66: #{tpu_custom_call.1} parent=1 // pred_check
      _
    $region67: #{tpu_custom_call.1} parent=1 // pred_check_branch
      %625 = sbr.rel (0) target = $region69
    $region68: #{tpu_custom_call.1} parent=1 // pred_region
      _
    $region69: #{tpu_custom_call.1} parent=1 // pred_fallthru
      _
    // Predicated region
    $region70: #{tpu_custom_call.1} parent=1 // pred_check
      _
    $region71: #{tpu_custom_call.1} parent=1 // pred_check_branch
      %627 = sbr.rel (0) target = $region73
    $region72: #{tpu_custom_call.1} parent=1 // pred_region
      _
    $region73: #{tpu_custom_call.1} parent=1 // pred_fallthru
      _
    %628 = vsyncpa [#allocation4], 1
    %629 = vsyncpa [#allocation6], 1
    %630 = vsyncpa [#allocation9], 1

</llo_original>
